<compile_context>
chip_gen: v7x
topology: tpu7x:2x2x1
jax: 0.10.0
libtpu: 0.0.40
codegen_flags: <defaults>
</compile_context>

<pallas_src>
import jax
import jax.numpy as jnp
from jax.experimental import pallas as pl
from jax.experimental.pallas import tpu as pltpu


def se_attention_kernel(x_ref, w1t_ref, w2t_ref, o_ref):
    # x_ref : (Bn, C, TV)   w1t_ref: (C, hidden)   w2t_ref: (hidden, C)
    x = x_ref[...]

    # AdaptiveAvgPool2d(1): mean over the flattened T*V lane axis, accumulated
    # in f32 without keeping an f32 shadow of the whole tile live.
    pooled = jnp.mean(x, axis=-1, dtype=jnp.float32)           # (Bn, C)

    # fc1 (no bias) + ReLU, batched across the tile.
    h = jnp.dot(pooled, w1t_ref[...], preferred_element_type=jnp.float32)
    h = jnp.maximum(h, 0.0)                                     # (Bn, hidden)

    # fc2 (no bias) + Sigmoid.
    s = jax.nn.sigmoid(
        jnp.dot(h, w2t_ref[...], preferred_element_type=jnp.float32))  # (Bn, C)

    # Scale input by the per-(batch, channel) gate in x's own dtype.
    o_ref[...] = (x * s.astype(x.dtype)[:, :, None]).astype(o_ref.dtype)


def _choose_batch_tile(N, C, TV, itemsize, vmem_cap, two_tc):
    """Pick Bn: ~4 MiB tiles, double-buffered footprint well inside VMEM."""
    per_batch = max(1, C * TV * itemsize)
    # in + out, double-buffered = 4 x tile; keep that well under physical VMEM.
    budget = min(24 << 20, vmem_cap // 3)
    bn = min((4 << 20) // per_batch, budget // (4 * per_batch))
    bn = int(max(1, min(bn, N)))
    if two_tc and N >= 2:
        steps = pl.cdiv(N, bn)
        if steps % 2 == 1:
            # Even (>=2) step count keeps both v7x TensorCores busy; don't
            # shrink below the ~1 MiB DMA floor unless needed for a 2nd step.
            steps_even = max(2, steps + 1)
            bn_even = int(max(1, pl.cdiv(N, steps_even)))
            if steps == 1 or bn_even * per_batch >= (1 << 20):
                bn = bn_even
    return bn


def action_recognition_forward(x, w1, w2, *, bn=None, donate_x=False):
    """x: (N, C, T, V). w1: (C//r, C), w2: (C, C//r) (PyTorch Linear weights).

    Returns (N, C, T, V) = x * sigmoid(relu(mean(x) @ W1^T) @ W2^T) broadcast.
    Set donate_x=True only if the caller does not reuse x afterwards.
    """
    N, C, T, V = x.shape
    TV = T * V
    hidden = w1.shape[0]

    vmem_cap = 128 << 20
    try:
        vmem_cap = int(pltpu.get_tpu_info().vmem_capacity_bytes)
    except Exception:
        pass
    two_tc = vmem_cap <= (64 << 20)  # v7x: 64 MiB VMEM per TC, 2 TCs per chip

    if bn is None:
        bn = _choose_batch_tile(N, C, TV, x.dtype.itemsize, vmem_cap, two_tc)
    bn = int(min(max(1, bn), N))
    n_steps = pl.cdiv(N, bn)  # last block may be partial; OOB writes dropped

    x_flat = x.reshape(N, C, TV)
    # Pre-transpose the Linear weights so the kernel does plain row-major
    # batched matmuls with no in-kernel (XLU) transpose.
    w1_t = jnp.transpose(w1)   # (C, hidden)
    w2_t = jnp.transpose(w2)   # (hidden, C)

    # Explicit scoped-VMEM limit derived from the chosen tile (+25% headroom),
    # so the tile picker and compiler budget agree across generations.
    tile_bytes = bn * C * TV * x.dtype.itemsize
    weight_bytes = (w1_t.size + w2_t.size) * w1_t.dtype.itemsize
    vmem_limit = int(1.25 * (4 * tile_bytes + 2 * weight_bytes)) + (1 << 20)
    vmem_limit = int(max(4 << 20, min(vmem_limit, vmem_cap - (2 << 20))))

    out_flat = pl.pallas_call(
        se_attention_kernel,
        out_shape=jax.ShapeDtypeStruct((N, C, TV), x.dtype),
        grid_spec=pl.GridSpec(
            grid=(n_steps,),
            in_specs=[
                pl.BlockSpec((bn, C, TV), lambda n: (n, 0, 0)),
                pl.BlockSpec((C, hidden), lambda n: (0, 0)),
                pl.BlockSpec((hidden, C), lambda n: (0, 0)),
            ],
            out_specs=pl.BlockSpec((bn, C, TV), lambda n: (n, 0, 0)),
        ),
        compiler_params=pltpu.CompilerParams(
            dimension_semantics=("parallel",),
            vmem_limit_bytes=vmem_limit),
        input_output_aliases={0: 0} if donate_x else {},
    )(x_flat, w1_t, w2_t)

    return out_flat.reshape(N, C, T, V)


def reference_forward(x, w1, w2):
    """Pure-JAX reference mirroring the PyTorch module semantics."""
    pooled = jnp.mean(x, axis=(2, 3))                 # AdaptiveAvgPool2d(1)
    h = jnp.maximum(pooled @ w1.T, 0.0)               # Linear + ReLU
    s = jax.nn.sigmoid(h @ w2.T)                      # Linear + Sigmoid
    return x * s[:, :, None, None]


if __name__ == "__main__":
    # Small shapes consistent with the module: reduction=16, so C=64 -> hidden=4.
    # Flattened spatial T*V = 8*16 = 128 (lane axis).
    N, C, T, V = 2, 64, 8, 16
    reduction = 16
    hidden = C // reduction

    key = jax.random.PRNGKey(0)
    kx, k1, k2, kx2 = jax.random.split(key, 4)

    x = jax.random.normal(kx, (N, C, T, V), dtype=jnp.float32)
    # Deterministic synthetic weights (SEAttention Linear layers have no bias).
    w1 = jax.random.normal(k1, (hidden, C), dtype=jnp.float32) * (1.0 / C) ** 0.5
    w2 = jax.random.normal(k2, (C, hidden), dtype=jnp.float32) * (1.0 / hidden) ** 0.5

    out = jax.block_until_ready(action_recognition_forward(x, w1, w2))
    ref = reference_forward(x, w1, w2)
    assert out.shape == (N, C, T, V)
    assert jnp.allclose(out, ref, atol=1e-5, rtol=1e-5), "mismatch vs reference"

    # Non-divisible N with a forced tile to exercise the partial last grid
    # block (no pad / no slice; OOB writes dropped, batches independent).
    x3 = jax.random.normal(kx2, (3, C, T, V), dtype=jnp.float32)
    out3 = jax.block_until_ready(action_recognition_forward(x3, w1, w2, bn=2))
    ref3 = reference_forward(x3, w1, w2)
    assert out3.shape == (3, C, T, V)
    assert jnp.allclose(out3, ref3, atol=1e-5, rtol=1e-5), "edge-block mismatch"

    print("KERNEL_OK")
</pallas_src>

<mosaic_0001>
module attributes {stable_mosaic.version = 11 : i64} {
  func.func @se_attention_kernel(%arg0: i32, %arg1: memref<2x64x128xf32, #tpu.memory_space<vmem>>, %arg2: memref<64x4xf32, #tpu.memory_space<vmem>>, %arg3: memref<4x64xf32, #tpu.memory_space<vmem>>, %arg4: memref<2x64x128xf32, #tpu.memory_space<vmem>>) attributes {dimension_semantics = [#tpu.dimension_semantics<parallel>], iteration_bounds = array<i64: 1>, scalar_prefetch = 0 : i64, scratch_operands = 0 : i64, tpu.core_type = #tpu.core_type<tc>, window_params = [{transform_indices = @transform_0, window_bounds = array<i64: 2, 64, 128>}, {pipeline_mode = #tpu.pipeline_mode<synchronous>, transform_indices = @transform_1, window_bounds = array<i64: 64, 4>}, {pipeline_mode = #tpu.pipeline_mode<synchronous>, transform_indices = @transform_2, window_bounds = array<i64: 4, 64>}, {transform_indices = @transform_3, window_bounds = array<i64: 2, 64, 128>}]} {
    %c0 = arith.constant 0 : index
    %c0_0 = arith.constant 0 : index
    %c0_1 = arith.constant 0 : index
    %0 = vector.load %arg1[%c0, %c0_0, %c0_1] : memref<2x64x128xf32, #tpu.memory_space<vmem>>, vector<2x64x128xf32>
    %cst = arith.constant dense<0.000000e+00> : vector<2x64xf32>
    %1 = vector.multi_reduction <add>, %0, %cst [2] : vector<2x64x128xf32> to vector<2x64xf32>
    %cst_2 = arith.constant 1.280000e+02 : f32
    %2 = vector.broadcast %cst_2 : f32 to vector<2x64xf32>
    %3 = arith.divf %1, %2 : vector<2x64xf32>
    %c0_3 = arith.constant 0 : index
    %c0_4 = arith.constant 0 : index
    %4 = vector.load %arg2[%c0_3, %c0_4] : memref<64x4xf32, #tpu.memory_space<vmem>>, vector<64x4xf32>
    %cst_5 = arith.constant dense<0.000000e+00> : vector<2x4xf32>
    %5 = tpu.matmul %3, %4, %cst_5 {dimension_numbers = #tpu.dot_dimension_numbers<[1], [0], [0], [1], [0, 0, 1, 1], [], []>} : vector<2x64xf32>, vector<64x4xf32>, vector<2x4xf32> -> vector<2x4xf32>
    %cst_6 = arith.constant 0.000000e+00 : f32
    %6 = vector.broadcast %cst_6 : f32 to vector<2x4xf32>
    %7 = arith.maximumf %5, %6 : vector<2x4xf32>
    %c0_7 = arith.constant 0 : index
    %c0_8 = arith.constant 0 : index
    %8 = vector.load %arg3[%c0_7, %c0_8] : memref<4x64xf32, #tpu.memory_space<vmem>>, vector<4x64xf32>
    %cst_9 = arith.constant dense<0.000000e+00> : vector<2x64xf32>
    %9 = tpu.matmul %7, %8, %cst_9 {dimension_numbers = #tpu.dot_dimension_numbers<[1], [0], [0], [1], [0, 0, 1, 1], [], []>} : vector<2x4xf32>, vector<4x64xf32>, vector<2x64xf32> -> vector<2x64xf32>
    %10 = arith.negf %9 : vector<2x64xf32>
    %11 = math.exp %10 : vector<2x64xf32>
    %cst_10 = arith.constant 1.000000e+00 : f32
    %12 = vector.broadcast %cst_10 : f32 to vector<2x64xf32>
    %13 = arith.addf %12, %11 : vector<2x64xf32>
    %14 = arith.divf %12, %13 : vector<2x64xf32>
    %15 = vector.shape_cast %14 : vector<2x64xf32> to vector<2x64x1xf32>
    %16 = vector.broadcast %15 : vector<2x64x1xf32> to vector<2x64x128xf32>
    %17 = arith.mulf %0, %16 : vector<2x64x128xf32>
    %c0_11 = arith.constant 0 : index
    %c0_12 = arith.constant 0 : index
    %c0_13 = arith.constant 0 : index
    %18 = vector.load %arg4[%c0_11, %c0_12, %c0_13] : memref<2x64x128xf32, #tpu.memory_space<vmem>>, vector<2x64x128xf32>
    tpu.vector_store %arg4[%c0_11, %c0_12, %c0_13], %17 {strides = array<i32>} : memref<2x64x128xf32, #tpu.memory_space<vmem>>, vector<2x64x128xf32>,
    return
  }
  func.func @transform_0(%arg0: i32) -> (i32, i32, i32) {
    %c0_i32 = arith.constant 0 : i32
    %c0_i32_0 = arith.constant 0 : i32
    %c0_i32_1 = arith.constant 0 : i32
    return %arg0, %c0_i32, %c0_i32_0 : i32, i32, i32
  }
  func.func @transform_1(%arg0: i32) -> (i32, i32) {
    %c0_i32 = arith.constant 0 : i32
    %c0_i32_0 = arith.constant 0 : i32
    %c0_i32_1 = arith.constant 0 : i32
    return %c0_i32, %c0_i32_0 : i32, i32
  }
  func.func @transform_2(%arg0: i32) -> (i32, i32) {
    %c0_i32 = arith.constant 0 : i32
    %c0_i32_0 = arith.constant 0 : i32
    %c0_i32_1 = arith.constant 0 : i32
    return %c0_i32, %c0_i32_0 : i32, i32
  }
  func.func @transform_3(%arg0: i32) -> (i32, i32, i32) {
    %c0_i32 = arith.constant 0 : i32
    %c0_i32_0 = arith.constant 0 : i32
    %c0_i32_1 = arith.constant 0 : i32
    return %arg0, %c0_i32, %c0_i32_0 : i32, i32, i32
  }
}

</mosaic_0001>

<llo_original>
// kernel: tpu_custom_call.1
$region0: #{tpu_custom_call.1}
  #allocation0 [shape = 'u32[]', space=smem, size = 0x4, offset = 0x4, fixed_abs, tag = 'smem constant byte address 0x4 - core index']
  #allocation1 [shape = 'u32[144,128]{1,0:T(1,128)}', space=vmem, size = 0x12000, scoped, tag = 'internal scratch']
  %s0 = inlined_call_operand.hbm [shape: f32[2,64,128], index: 0, kind: input, shape index: {}]
  %s1 = inlined_call_operand.vmem [shape: f32[64,4], index: 1, kind: input, shape index: {}]
  %s2 = inlined_call_operand.vmem [shape: f32[4,64], index: 2, kind: input, shape index: {}]
  %s3 = inlined_call_operand.hbm [shape: f32[2,64,128], index: 3, kind: output, shape index: {}]
  %s4 = sld [smem:[#allocation0]]
  $region26: #{tpu_custom_call.1} parent=0
    _
  %s6 = ssub.s32 1, %s4
  %s7 = scalar_select 0, %s6, %s4
  $region1: #{tpu_custom_call.1} parent=0
    #allocation2 [shape = 'u8[65536]{0}', space=vmem, size = 0x10000, scoped, tag = 'input window, operand 0, single buffered']
    #allocation3 [shape = 's32[1]{0}', space=sflag, size = 0x4, scoped, tag = 'scoped memory for tpu_custom_call.1']
    #allocation4 [shape = 's32[1]{0}', space=sflag, size = 0x4, scoped, tag = 'scoped memory for tpu_custom_call.1']
    #allocation5 [shape = 'u8[65536]{0}', space=vmem, size = 0x10000, scoped, tag = 'output window, operand 0, single buffered']
    %8 = vsyncpa [#allocation3], 0
    %9 = vsyncpa [#allocation4], 0
    // Predicated region
    $region2: #{tpu_custom_call.1} parent=1 // pred_check
      _
    $region3: #{tpu_custom_call.1} parent=1 // pred_check_branch
      %11 = sbr.rel (0) target = $region5
    $region4: #{tpu_custom_call.1} parent=1 // pred_region
      %s13 = ssub.s32 2048, 2048
      %14 = vsyncadd [#allocation3], %s13
      %s15 = sshll.u32 [#allocation2], 4
      %s16 = int_to_ptr.vmem [resolvable:$true] %s15
      %21 = dma.hbm_to_vmem [thread:$0]  %s0, 2048, %s16, [#allocation3], 128, 128, 8
    $region5: #{tpu_custom_call.1} parent=1 // pred_fallthru
      _
    // Predicated region
    $region6: #{tpu_custom_call.1} parent=1 // pred_check
      _
    $region7: #{tpu_custom_call.1} parent=1 // pred_check_branch
      %23 = sbr.rel (0) target = $region9
    $region8: #{tpu_custom_call.1} parent=1 // pred_region
      _
    $region9: #{tpu_custom_call.1} parent=1 // pred_fallthru
      _
    // Predicated region
    $region10: #{tpu_custom_call.1} parent=1 // pred_check
      _
    $region11: #{tpu_custom_call.1} parent=1 // pred_check_branch
      %25 = sbr.rel (0) target = $region13
    $region12: #{tpu_custom_call.1} parent=1 // pred_region
      _
    $region13: #{tpu_custom_call.1} parent=1 // pred_fallthru
      _
    // Predicated region
    $region14: #{tpu_custom_call.1} parent=1 // pred_check
      _
    $region15: #{tpu_custom_call.1} parent=1 // pred_check_branch
      %27 = sbr.rel (0) target = $region17
    $region16: #{tpu_custom_call.1} parent=1 // pred_region
      %28 = dma.done [#allocation3], 2048
    $region17: #{tpu_custom_call.1} parent=1 // pred_fallthru
      _
    %v29 = vld [vmem:[#allocation2] sm:$0xff]
    %v30 = vld [vmem:[#allocation2 + $0x8] sm:$0xff]
    %v31 = vld [vmem:[#allocation2 + $0x10] sm:$0xff]
    %v32 = vld [vmem:[#allocation2 + $0x18] sm:$0xff]
    %v33 = vld [vmem:[#allocation2 + $0x20] sm:$0xff]
    %v34 = vld [vmem:[#allocation2 + $0x28] sm:$0xff]
    %v35 = vld [vmem:[#allocation2 + $0x30] sm:$0xff]
    %v36 = vld [vmem:[#allocation2 + $0x38] sm:$0xff]
    %v37 = vld [vmem:[#allocation2 + $0x40] sm:$0xff]
    %v38 = vld [vmem:[#allocation2 + $0x48] sm:$0xff]
    %v39 = vld [vmem:[#allocation2 + $0x50] sm:$0xff]
    %v40 = vld [vmem:[#allocation2 + $0x58] sm:$0xff]
    %v41 = vld [vmem:[#allocation2 + $0x60] sm:$0xff]
    %v42 = vld [vmem:[#allocation2 + $0x68] sm:$0xff]
    %v43 = vld [vmem:[#allocation2 + $0x70] sm:$0xff]
    %v44 = vld [vmem:[#allocation2 + $0x78] sm:$0xff]
    %45 = vadd.xlane.f32.xlu0 %v29
    %v46 = vpop.xlane.xlu0 %45
    %47 = vadd.xlane.f32.xlu0 %v30
    %v48 = vpop.xlane.xlu0 %47
    %49 = vadd.xlane.f32.xlu0 %v31
    %v50 = vpop.xlane.xlu0 %49
    %51 = vadd.xlane.f32.xlu0 %v32
    %v52 = vpop.xlane.xlu0 %51
    %53 = vadd.xlane.f32.xlu0 %v33
    %v54 = vpop.xlane.xlu0 %53
    %55 = vadd.xlane.f32.xlu0 %v34
    %v56 = vpop.xlane.xlu0 %55
    %57 = vadd.xlane.f32.xlu0 %v35
    %v58 = vpop.xlane.xlu0 %57
    %59 = vadd.xlane.f32.xlu0 %v36
    %v60 = vpop.xlane.xlu0 %59
    %61 = vadd.xlane.f32.xlu0 %v37
    %v62 = vpop.xlane.xlu0 %61
    %63 = vadd.xlane.f32.xlu0 %v38
    %v64 = vpop.xlane.xlu0 %63
    %65 = vadd.xlane.f32.xlu0 %v39
    %v66 = vpop.xlane.xlu0 %65
    %67 = vadd.xlane.f32.xlu0 %v40
    %v68 = vpop.xlane.xlu0 %67
    %69 = vadd.xlane.f32.xlu0 %v41
    %v70 = vpop.xlane.xlu0 %69
    %71 = vadd.xlane.f32.xlu0 %v42
    %v72 = vpop.xlane.xlu0 %71
    %73 = vadd.xlane.f32.xlu0 %v43
    %v74 = vpop.xlane.xlu0 %73
    %75 = vadd.xlane.f32.xlu0 %v44
    %v76 = vpop.xlane.xlu0 %75
    %v77 = vrcp.pop 128.0
    %v78 = vmul.f32 %v46, %v77
    %v79 = vmul.f32 %v48, %v77
    %v80 = vmul.f32 %v50, %v77
    %v81 = vmul.f32 %v52, %v77
    %v82 = vmul.f32 %v54, %v77
    %v83 = vmul.f32 %v56, %v77
    %v84 = vmul.f32 %v58, %v77
    %v85 = vmul.f32 %v60, %v77
    %v86 = vmul.f32 %v62, %v77
    %v87 = vmul.f32 %v64, %v77
    %v88 = vmul.f32 %v66, %v77
    %v89 = vmul.f32 %v68, %v77
    %v90 = vmul.f32 %v70, %v77
    %v91 = vmul.f32 %v72, %v77
    %v92 = vmul.f32 %v74, %v77
    %v93 = vmul.f32 %v76, %v77
    %v94 = vld [vmem:[%s1] sm:$0xff]
    %v95 = vld [vmem:[%s1 + $0x8] sm:$0xff]
    %v96 = vld [vmem:[%s1 + $0x10] sm:$0xff]
    %v97 = vld [vmem:[%s1 + $0x18] sm:$0xff]
    %v98 = vld [vmem:[%s1 + $0x20] sm:$0xff]
    %v99 = vld [vmem:[%s1 + $0x28] sm:$0xff]
    %v100 = vld [vmem:[%s1 + $0x30] sm:$0xff]
    %v101 = vld [vmem:[%s1 + $0x38] sm:$0xff]
    %v118 = vlaneseq
    %v119 = vand.u32 %v118, 127
    %v120 = vlaneseq
    %v121 = vshrl.u32 %v120, 7
    %v122 = vsub.s32 %v119, %v121
    %v123 = vrot.slane %v78, %v122
    %v124 = vadd.s32 %v119, 4294967288
    %v125 = vlaneseq
    %v126 = vshrl.u32 %v125, 7
    %v127 = vsub.s32 %v124, %v126
    %v128 = vrot.slane %v79, %v127
    %vm129 = vcmask 130112
    %v130 = vsel %vm129, %v128, %v123
    %v131 = vadd.s32 %v119, 4294967280
    %v132 = vlaneseq
    %v133 = vshrl.u32 %v132, 7
    %v134 = vsub.s32 %v131, %v133
    %v135 = vrot.slane %v80, %v134
    %vm136 = vcmask 195712
    %v137 = vsel %vm136, %v135, %v130
    %v138 = vadd.s32 %v119, 4294967272
    %v139 = vlaneseq
    %v140 = vshrl.u32 %v139, 7
    %v141 = vsub.s32 %v138, %v140
    %v142 = vrot.slane %v81, %v141
    %vm143 = vcmask 261312
    %v144 = vsel %vm143, %v142, %v137
    %v145 = vadd.s32 %v119, 4294967264
    %v146 = vlaneseq
    %v147 = vshrl.u32 %v146, 7
    %v148 = vsub.s32 %v145, %v147
    %v149 = vrot.slane %v82, %v148
    %vm150 = vcmask 326912
    %v151 = vsel %vm150, %v149, %v144
    %v152 = vadd.s32 %v119, 4294967256
    %v153 = vlaneseq
    %v154 = vshrl.u32 %v153, 7
    %v155 = vsub.s32 %v152, %v154
    %v156 = vrot.slane %v83, %v155
    %vm157 = vcmask 392512
    %v158 = vsel %vm157, %v156, %v151
    %v159 = vadd.s32 %v119, 4294967248
    %v160 = vlaneseq
    %v161 = vshrl.u32 %v160, 7
    %v162 = vsub.s32 %v159, %v161
    %v163 = vrot.slane %v84, %v162
    %vm164 = vcmask 458112
    %v165 = vsel %vm164, %v163, %v158
    %v166 = vadd.s32 %v119, 4294967240
    %v167 = vlaneseq
    %v168 = vshrl.u32 %v167, 7
    %v169 = vsub.s32 %v166, %v168
    %v170 = vrot.slane %v85, %v169
    %vm171 = vcmask 523712
    %v172 = vsel %vm171, %v170, %v165
    %v173 = vlaneseq
    %v174 = vshrl.u32 %v173, 7
    %v175 = vsub.s32 %v119, %v174
    %v176 = vrot.slane %v86, %v175
    %v177 = vlaneseq
    %v178 = vshrl.u32 %v177, 7
    %v179 = vsub.s32 %v124, %v178
    %v180 = vrot.slane %v87, %v179
    %v181 = vsel %vm129, %v180, %v176
    %v182 = vlaneseq
    %v183 = vshrl.u32 %v182, 7
    %v184 = vsub.s32 %v131, %v183
    %v185 = vrot.slane %v88, %v184
    %v186 = vsel %vm136, %v185, %v181
    %v187 = vlaneseq
    %v188 = vshrl.u32 %v187, 7
    %v189 = vsub.s32 %v138, %v188
    %v190 = vrot.slane %v89, %v189
    %v191 = vsel %vm143, %v190, %v186
    %v192 = vlaneseq
    %v193 = vshrl.u32 %v192, 7
    %v194 = vsub.s32 %v145, %v193
    %v195 = vrot.slane %v90, %v194
    %v196 = vsel %vm150, %v195, %v191
    %v197 = vlaneseq
    %v198 = vshrl.u32 %v197, 7
    %v199 = vsub.s32 %v152, %v198
    %v200 = vrot.slane %v91, %v199
    %v201 = vsel %vm157, %v200, %v196
    %v202 = vlaneseq
    %v203 = vshrl.u32 %v202, 7
    %v204 = vsub.s32 %v159, %v203
    %v205 = vrot.slane %v92, %v204
    %v206 = vsel %vm164, %v205, %v201
    %v207 = vlaneseq
    %v208 = vshrl.u32 %v207, 7
    %v209 = vsub.s32 %v166, %v208
    %v210 = vrot.slane %v93, %v209
    %v211 = vsel %vm171, %v210, %v206
    %vm212 = vcmask 1041409
    %v213 = vsel %vm212, %v211, %v172
    %vm214 = vcmask 523264
    %v215 = vsel %vm214, %v213, 0
    %217 = vmatprep.subr.mxu0 0.0
    %218 = vmatpush1.msra.mxu0 %v94
    %219 = vmatprep.subr.mxu0 0.0
    %220 = vmatpush1.msra.mxu0 %v95
    %221 = vmatprep.subr.mxu0 0.0
    %222 = vmatpush1.msra.mxu0 %v96
    %223 = vmatprep.subr.mxu0 0.0
    %224 = vmatpush1.msra.mxu0 %v97
    %225 = vmatprep.subr.mxu0 0.0
    %226 = vmatpush1.msra.mxu0 %v98
    %227 = vmatprep.subr.mxu0 0.0
    %228 = vmatpush1.msra.mxu0 %v99
    %229 = vmatprep.subr.mxu0 0.0
    %230 = vmatpush1.msra.mxu0 %v100
    %231 = vmatprep.subr.mxu0 0.0
    %232 = vmatpush1.msra.mxu0 %v101
    %233 = vmatprep.subr.mxu0 0.0
    %234 = vmatpush1.msra.mxu0 0.0
    %235 = vmatprep.subr.mxu0 0.0
    %236 = vmatpush1.msra.mxu0 0.0
    %237 = vmatprep.subr.mxu0 0.0
    %238 = vmatpush1.msra.mxu0 0.0
    %239 = vmatprep.subr.mxu0 0.0
    %240 = vmatpush1.msra.mxu0 0.0
    %241 = vmatprep.subr.mxu0 0.0
    %242 = vmatpush1.msra.mxu0 0.0
    %243 = vmatprep.subr.mxu0 0.0
    %244 = vmatpush1.msra.mxu0 0.0
    %245 = vmatprep.subr.mxu0 0.0
    %246 = vmatpush1.msra.mxu0 0.0
    %247 = vmatprep.subr.mxu0 0.0
    %248 = vmatpush1.msra.mxu0 0.0
    %249 = vmatprep.subr.mxu0 0.0
    %250 = vmatpush1.msra.mxu0 0.0
    %251 = vmatprep.subr.mxu0 0.0
    %252 = vmatpush1.msra.mxu0 0.0
    %253 = vmatprep.subr.mxu0 0.0
    %254 = vmatpush1.msra.mxu0 0.0
    %255 = vmatprep.subr.mxu0 0.0
    %256 = vmatpush1.msra.mxu0 0.0
    %257 = vmatprep.subr.mxu0 0.0
    %258 = vmatpush1.msra.mxu0 0.0
    %259 = vmatprep.subr.mxu0 0.0
    %260 = vmatpush1.msra.mxu0 0.0
    %261 = vmatprep.subr.mxu0 0.0
    %262 = vmatpush1.msra.mxu0 0.0
    %263 = vmatprep.subr.mxu0 0.0
    %264 = vmatpush1.msra.mxu0 0.0
    %265 = vmatprep.subr.mxu0 0.0
    %266 = vmatpush1.msra.mxu0 0.0
    %267 = vmatprep.subr.mxu0 0.0
    %268 = vmatpush1.msra.mxu0 0.0
    %269 = vmatprep.subr.mxu0 0.0
    %270 = vmatpush1.msra.mxu0 0.0
    %271 = vmatprep.subr.mxu0 0.0
    %272 = vmatpush1.msra.mxu0 0.0
    %273 = vmatprep.subr.mxu0 0.0
    %274 = vmatpush1.msra.mxu0 0.0
    %275 = vmatprep.subr.mxu0 0.0
    %276 = vmatpush1.msra.mxu0 0.0
    %277 = vmatprep.subr.mxu0 0.0
    %278 = vmatpush1.msra.mxu0 0.0
    %279 = vmatprep.subr.mxu0 0.0
    %280 = vmatpush1.msra.mxu0 0.0
    %281 = vmatprep.mubr.f32.mxu0 0.0
    %282 = vmatmul.mubr.f32.gmra.mrb[0].mxu0 %v215
    %v283 = vpop.f32.mrb[0].mxu0
    %v284 = vadd.f32 0.0, %v283
    %v285 = vpop.f32.mrb[0].mxu0
    %286 = vdwg.mxu0
    %v287 = vmax.f32 %v284, 0.0
    %v288 = vld [vmem:[%s2] sm:$0xf]
    %vm289 = vcmask 31744
    %v291 = vsel %vm289, %v287, 0
    %vm293 = vcmask 1043456
    %v295 = vsel %vm293, %v288, 0
    %297 = vmatprep.subr.mxu0 0.0
    %298 = vmatpush1.msra.mxu0 %v295
    %299 = vmatprep.subr.mxu0 0.0
    %300 = vmatpush1.msra.mxu0 0.0
    %301 = vmatprep.subr.mxu0 0.0
    %302 = vmatpush1.msra.mxu0 0.0
    %303 = vmatprep.subr.mxu0 0.0
    %304 = vmatpush1.msra.mxu0 0.0
    %305 = vmatprep.subr.mxu0 0.0
    %306 = vmatpush1.msra.mxu0 0.0
    %307 = vmatprep.subr.mxu0 0.0
    %308 = vmatpush1.msra.mxu0 0.0
    %309 = vmatprep.subr.mxu0 0.0
    %310 = vmatpush1.msra.mxu0 0.0
    %311 = vmatprep.subr.mxu0 0.0
    %312 = vmatpush1.msra.mxu0 0.0
    %313 = vmatprep.subr.mxu0 0.0
    %314 = vmatpush1.msra.mxu0 0.0
    %315 = vmatprep.subr.mxu0 0.0
    %316 = vmatpush1.msra.mxu0 0.0
    %317 = vmatprep.subr.mxu0 0.0
    %318 = vmatpush1.msra.mxu0 0.0
    %319 = vmatprep.subr.mxu0 0.0
    %320 = vmatpush1.msra.mxu0 0.0
    %321 = vmatprep.subr.mxu0 0.0
    %322 = vmatpush1.msra.mxu0 0.0
    %323 = vmatprep.subr.mxu0 0.0
    %324 = vmatpush1.msra.mxu0 0.0
    %325 = vmatprep.subr.mxu0 0.0
    %326 = vmatpush1.msra.mxu0 0.0
    %327 = vmatprep.subr.mxu0 0.0
    %328 = vmatpush1.msra.mxu0 0.0
    %329 = vmatprep.subr.mxu0 0.0
    %330 = vmatpush1.msra.mxu0 0.0
    %331 = vmatprep.subr.mxu0 0.0
    %332 = vmatpush1.msra.mxu0 0.0
    %333 = vmatprep.subr.mxu0 0.0
    %334 = vmatpush1.msra.mxu0 0.0
    %335 = vmatprep.subr.mxu0 0.0
    %336 = vmatpush1.msra.mxu0 0.0
    %337 = vmatprep.subr.mxu0 0.0
    %338 = vmatpush1.msra.mxu0 0.0
    %339 = vmatprep.subr.mxu0 0.0
    %340 = vmatpush1.msra.mxu0 0.0
    %341 = vmatprep.subr.mxu0 0.0
    %342 = vmatpush1.msra.mxu0 0.0
    %343 = vmatprep.subr.mxu0 0.0
    %344 = vmatpush1.msra.mxu0 0.0
    %345 = vmatprep.subr.mxu0 0.0
    %346 = vmatpush1.msra.mxu0 0.0
    %347 = vmatprep.subr.mxu0 0.0
    %348 = vmatpush1.msra.mxu0 0.0
    %349 = vmatprep.subr.mxu0 0.0
    %350 = vmatpush1.msra.mxu0 0.0
    %351 = vmatprep.subr.mxu0 0.0
    %352 = vmatpush1.msra.mxu0 0.0
    %353 = vmatprep.subr.mxu0 0.0
    %354 = vmatpush1.msra.mxu0 0.0
    %355 = vmatprep.subr.mxu0 0.0
    %356 = vmatpush1.msra.mxu0 0.0
    %357 = vmatprep.subr.mxu0 0.0
    %358 = vmatpush1.msra.mxu0 0.0
    %359 = vmatprep.subr.mxu0 0.0
    %360 = vmatpush1.msra.mxu0 0.0
    %361 = vmatprep.mubr.f32.mxu0 0.0
    %362 = vmatmul.mubr.f32.gmra.mrb[0].mxu0 %v291
    %v363 = vpop.f32.mrb[0].mxu0
    %v364 = vadd.f32 0.0, %v363
    %v365 = vpop.f32.mrb[0].mxu0
    %366 = vdwg.mxu0
    %v367 = vxor.u32 %v364, 2147483648
    %v368 = vmul.f32 %v367, 1.442695
    %v369 = vpow.pop %v368
    %v370 = vadd.f32 %v369, 1.0
    %v371 = vrcp.pop %v370
    %v372 = vmul.f32 1.0, %v371
    %v373 = vlaneseq
    %v374 = vshrl.u32 %v373, 7
    %v375 = vsub.s32 0, %v374
    %v376 = vrot.slane %v372, %v375
    %378 = vbcast.lane.b32.xlu0 %v376, 256
    %v379 = vpop.permute.xlu0 %378
    %s381 = sor.u32 256, 8
    %382 = vbcast.lane.b32.xlu0 %v376, %s381
    %v383 = vpop.permute.xlu0 %382
    %s385 = sor.u32 256, 16
    %386 = vbcast.lane.b32.xlu0 %v376, %s385
    %v387 = vpop.permute.xlu0 %386
    %s389 = sor.u32 256, 24
    %390 = vbcast.lane.b32.xlu0 %v376, %s389
    %v391 = vpop.permute.xlu0 %390
    %s393 = sor.u32 256, 32
    %394 = vbcast.lane.b32.xlu0 %v376, %s393
    %v395 = vpop.permute.xlu0 %394
    %s397 = sor.u32 256, 40
    %398 = vbcast.lane.b32.xlu0 %v376, %s397
    %v399 = vpop.permute.xlu0 %398
    %s401 = sor.u32 256, 48
    %402 = vbcast.lane.b32.xlu0 %v376, %s401
    %v403 = vpop.permute.xlu0 %402
    %s405 = sor.u32 256, 56
    %406 = vbcast.lane.b32.xlu0 %v376, %s405
    %v407 = vpop.permute.xlu0 %406
    %v408 = vlaneseq
    %v409 = vshrl.u32 %v408, 7
    %v410 = vsub.s32 1, %v409
    %v411 = vrot.slane %v372, %v410
    %413 = vbcast.lane.b32.xlu0 %v411, 256
    %v414 = vpop.permute.xlu0 %413
    %s416 = sor.u32 256, 8
    %417 = vbcast.lane.b32.xlu0 %v411, %s416
    %v418 = vpop.permute.xlu0 %417
    %s420 = sor.u32 256, 16
    %421 = vbcast.lane.b32.xlu0 %v411, %s420
    %v422 = vpop.permute.xlu0 %421
    %s424 = sor.u32 256, 24
    %425 = vbcast.lane.b32.xlu0 %v411, %s424
    %v426 = vpop.permute.xlu0 %425
    %s428 = sor.u32 256, 32
    %429 = vbcast.lane.b32.xlu0 %v411, %s428
    %v430 = vpop.permute.xlu0 %429
    %s432 = sor.u32 256, 40
    %433 = vbcast.lane.b32.xlu0 %v411, %s432
    %v434 = vpop.permute.xlu0 %433
    %s436 = sor.u32 256, 48
    %437 = vbcast.lane.b32.xlu0 %v411, %s436
    %v438 = vpop.permute.xlu0 %437
    %s440 = sor.u32 256, 56
    %441 = vbcast.lane.b32.xlu0 %v411, %s440
    %v442 = vpop.permute.xlu0 %441
    %v443 = vmul.f32 %v29, %v379
    %v444 = vmul.f32 %v30, %v383
    %v445 = vmul.f32 %v31, %v387
    %v446 = vmul.f32 %v32, %v391
    %v447 = vmul.f32 %v33, %v395
    %v448 = vmul.f32 %v34, %v399
    %v449 = vmul.f32 %v35, %v403
    %v450 = vmul.f32 %v36, %v407
    %v451 = vmul.f32 %v37, %v414
    %v452 = vmul.f32 %v38, %v418
    %v453 = vmul.f32 %v39, %v422
    %v454 = vmul.f32 %v40, %v426
    %v455 = vmul.f32 %v41, %v430
    %v456 = vmul.f32 %v42, %v434
    %v457 = vmul.f32 %v43, %v438
    %v458 = vmul.f32 %v44, %v442
    %459 = vst [vmem:[#allocation5] sm:$0xff] %v443
    %460 = vst [vmem:[#allocation5 + $0x8] sm:$0xff] %v444
    %461 = vst [vmem:[#allocation5 + $0x10] sm:$0xff] %v445
    %462 = vst [vmem:[#allocation5 + $0x18] sm:$0xff] %v446
    %463 = vst [vmem:[#allocation5 + $0x20] sm:$0xff] %v447
    %464 = vst [vmem:[#allocation5 + $0x28] sm:$0xff] %v448
    %465 = vst [vmem:[#allocation5 + $0x30] sm:$0xff] %v449
    %466 = vst [vmem:[#allocation5 + $0x38] sm:$0xff] %v450
    %467 = vst [vmem:[#allocation5 + $0x40] sm:$0xff] %v451
    %468 = vst [vmem:[#allocation5 + $0x48] sm:$0xff] %v452
    %469 = vst [vmem:[#allocation5 + $0x50] sm:$0xff] %v453
    %470 = vst [vmem:[#allocation5 + $0x58] sm:$0xff] %v454
    %471 = vst [vmem:[#allocation5 + $0x60] sm:$0xff] %v455
    %472 = vst [vmem:[#allocation5 + $0x68] sm:$0xff] %v456
    %473 = vst [vmem:[#allocation5 + $0x70] sm:$0xff] %v457
    %474 = vst [vmem:[#allocation5 + $0x78] sm:$0xff] %v458
    // Predicated region
    $region18: #{tpu_custom_call.1} parent=1 // pred_check
      _
    $region19: #{tpu_custom_call.1} parent=1 // pred_check_branch
      %476 = sbr.rel (0) target = $region21
    $region20: #{tpu_custom_call.1} parent=1 // pred_region
      %s478 = ssub.s32 2048, 2048
      %479 = vsyncadd [#allocation4], %s478
      %s480 = sshll.u32 [#allocation5], 4
      %s481 = int_to_ptr.vmem [resolvable:$true] %s480
      %486 = dma.vmem_to_hbm [thread:$0]  %s481, 2048, %s3, [#allocation4], 128, 128, 8
    $region21: #{tpu_custom_call.1} parent=1 // pred_fallthru
      _
    // Predicated region
    $region22: #{tpu_custom_call.1} parent=1 // pred_check
      _
    $region23: #{tpu_custom_call.1} parent=1 // pred_check_branch
      %488 = sbr.rel (0) target = $region25
    $region24: #{tpu_custom_call.1} parent=1 // pred_region
      %489 = dma.done [#allocation4], 2048
    $region25: #{tpu_custom_call.1} parent=1 // pred_fallthru
      _
    %490 = vsyncpa [#allocation3], 1
    %491 = vsyncpa [#allocation4], 1

</llo_original>
